<compile_context>
chip_gen: v7x
topology: tpu7x:2x2x1
jax: 0.10.0
libtpu: 0.0.40
codegen_flags: <defaults>
</compile_context>

<pallas_src>
import math

import jax
import jax.numpy as jnp
from jax import lax
from jax.experimental import pallas as pl
from jax.experimental.pallas import tpu as pltpu

LN_EPS = 1e-5  # PyTorch nn.LayerNorm default


def predictor_kernel(x_ref, w0_ref, b0_ref, g_ref, beta_ref, w1_ref, b1_ref, o_ref):
    # Resident bf16 weights; f32 bias / LayerNorm parameters.
    w0 = w0_ref[...]
    w1 = w1_ref[...]
    b0 = b0_ref[...]
    g = g_ref[...]
    beta = beta_ref[...]
    b1 = b1_ref[...]

    block_b = x_ref.shape[0]
    H = w0_ref.shape[1]
    inv_h = jnp.float32(1.0 / H)

    # Process the block in <=128-row sub-tiles to bound vreg live ranges.
    chunk = min(block_b, 128)
    if block_b % chunk:
        chunk = math.gcd(block_b, 128)
    n_chunks = block_b // chunk

    def process(row):
        xc = x_ref[pl.ds(row, chunk), :]  # bf16 tile
        # hidden_0: x @ W0 + b0  (MXU bf16 inputs, f32 accumulate)
        h = jnp.dot(xc, w0, preferred_element_type=jnp.float32) + b0
        # ReLU
        h = jnp.maximum(h, 0.0)
        # LayerNorm over the last dim, biased variance, affine (gamma/beta).
        # sum and sum-of-squares are independent -> both XLU reductions overlap.
        s1 = jnp.sum(h, axis=-1, keepdims=True)
        s2 = jnp.sum(h * h, axis=-1, keepdims=True)
        mean = s1 * inv_h
        var = s2 * inv_h - mean * mean
        hn = (h - mean) * lax.rsqrt(var + LN_EPS) * g + beta
        # dropout(p, training=False) -> identity (no-op)
        # hidden_1: hn @ W1 + b1
        out = jnp.dot(hn.astype(jnp.bfloat16), w1,
                      preferred_element_type=jnp.float32) + b1
        o_ref[pl.ds(row, chunk), :] = out.astype(o_ref.dtype)

    if n_chunks == 1:
        process(0)
    else:
        def body(c, carry):
            process(pl.multiple_of(c * chunk, chunk))
            return carry
        lax.fori_loop(0, n_chunks, body, 0, unroll=True)


def _choose_block_b(B, target=256):
    """Largest power-of-two tile <= target that divides B; >=2 grid steps when possible."""
    if B <= 128 or B % 8 != 0:
        return B  # single full-batch tile (full-dim block is always legal)
    bb = target
    while bb > 8 and B % bb != 0:
        bb //= 2
    if B % bb != 0:
        return B
    # Prefer >=2 grid steps so v7x can shard the 'parallel' axis across both TCs.
    if B // bb < 2 and bb >= 16:
        bb //= 2
    return bb


def predictor_forward(x, w0, b0, gamma, beta, w1, b1, *, block_b=None):
    B, d_in = x.shape
    H = w0.shape[1]
    d_out = w1.shape[1]
    if block_b is None:
        block_b = _choose_block_b(B)
    assert B % block_b == 0

    # bf16 MXU operands (halves weight VMEM residency + x DMA bytes);
    # biases / LN params stay f32.
    x_bf = x.astype(jnp.bfloat16)
    w0_bf = w0.astype(jnp.bfloat16)
    w1_bf = w1.astype(jnp.bfloat16)

    b0_2d = b0.reshape(1, H).astype(jnp.float32)
    g_2d = gamma.reshape(1, H).astype(jnp.float32)
    beta_2d = beta.reshape(1, H).astype(jnp.float32)
    b1_2d = b1.reshape(1, d_out).astype(jnp.float32)

    cost = pl.CostEstimate(
        flops=2 * B * (d_in * H + H * d_out),
        transcendentals=B,  # one rsqrt per row (LayerNorm)
        bytes_accessed=(B * d_in * 2 + B * d_out * 4
                        + d_in * H * 2 + H * d_out * 2
                        + (3 * H + d_out) * 4),
    )

    return pl.pallas_call(
        predictor_kernel,
        out_shape=jax.ShapeDtypeStruct((B, d_out), jnp.float32),
        grid=(B // block_b,),
        in_specs=[
            pl.BlockSpec((block_b, d_in), lambda i: (i, 0)),  # x tile (bf16)
            pl.BlockSpec((d_in, H), lambda i: (0, 0)),        # W0 resident (bf16)
            pl.BlockSpec((1, H), lambda i: (0, 0)),           # b0
            pl.BlockSpec((1, H), lambda i: (0, 0)),           # gamma
            pl.BlockSpec((1, H), lambda i: (0, 0)),           # beta
            pl.BlockSpec((H, d_out), lambda i: (0, 0)),       # W1 resident (bf16)
            pl.BlockSpec((1, d_out), lambda i: (0, 0)),       # b1
        ],
        out_specs=pl.BlockSpec((block_b, d_out), lambda i: (i, 0)),
        compiler_params=pltpu.CompilerParams(
            dimension_semantics=("parallel",)),
        cost_estimate=cost,
    )(x_bf, w0_bf, b0_2d, g_2d, beta_2d, w1_bf, b1_2d)


def xavier_normal(key, fan_in, fan_out):
    # torch.nn.init.xavier_normal_: std = sqrt(2 / (fan_in + fan_out))
    std = (2.0 / (fan_in + fan_out)) ** 0.5
    return std * jax.random.normal(key, (fan_in, fan_out), dtype=jnp.float32)


def reference_f32(x, w0, b0, gamma, beta, w1, b1):
    # Module semantics in full f32.
    h = jnp.maximum(x @ w0 + b0, 0.0)
    mean = jnp.mean(h, axis=-1, keepdims=True)
    var = jnp.mean((h - mean) ** 2, axis=-1, keepdims=True)
    hn = (h - mean) * lax.rsqrt(var + LN_EPS) * gamma + beta
    return hn @ w1 + b1


def reference_bf16(x, w0, b0, gamma, beta, w1, b1):
    # Same numerics as the kernel (bf16 MXU operands, f32 accumulate / LN math).
    xb = x.astype(jnp.bfloat16)
    h = jnp.dot(xb, w0.astype(jnp.bfloat16),
                preferred_element_type=jnp.float32) + b0
    h = jnp.maximum(h, 0.0)
    mean = jnp.mean(h, axis=-1, keepdims=True)
    var = jnp.mean((h - mean) ** 2, axis=-1, keepdims=True)
    hn = (h - mean) * lax.rsqrt(var + LN_EPS) * gamma + beta
    return jnp.dot(hn.astype(jnp.bfloat16), w1.astype(jnp.bfloat16),
                   preferred_element_type=jnp.float32) + b1


if __name__ == "__main__":
    input_size = 128
    hidden = 256
    output_size = 128
    batch = 8
    dropout_p = 0.1  # unused: module has training=False, so dropout is identity

    key = jax.random.PRNGKey(0)
    k_x, k_w0, k_w1 = jax.random.split(key, 3)

    x = jax.random.normal(k_x, (batch, input_size), dtype=jnp.float32)

    # hidden_0: Linear(input_size, 256), xavier_normal weight
    w0 = xavier_normal(k_w0, input_size, hidden)  # stored as (in, out)
    b0 = jnp.zeros((hidden,), dtype=jnp.float32)
    # LayerNorm(256): gamma=1, beta=0
    gamma = jnp.ones((hidden,), dtype=jnp.float32)
    beta = jnp.zeros((hidden,), dtype=jnp.float32)
    # hidden_1: Linear(256, output_size)
    w1 = xavier_normal(k_w1, hidden, output_size)
    b1 = jnp.zeros((output_size,), dtype=jnp.float32)

    out = predictor_forward(x, w0, b0, gamma, beta, w1, b1)
    out = jax.block_until_ready(out)

    assert out.shape == (batch, output_size)
    # Tight check against a reference with the same bf16-MXU / f32-accumulate numerics.
    ref_b = reference_bf16(x, w0, b0, gamma, beta, w1, b1)
    assert jnp.allclose(out, ref_b, atol=2e-2, rtol=2e-2)
    # Looser check against the pure-f32 module semantics (bf16 precision drift only).
    ref_f = reference_f32(x, w0, b0, gamma, beta, w1, b1)
    assert jnp.allclose(out, ref_f, atol=6e-2, rtol=6e-2)

    print("KERNEL_OK")
</pallas_src>

<mosaic_0001>
module attributes {stable_mosaic.version = 11 : i64} {
  func.func @predictor_kernel(%arg0: i32, %arg1: memref<8x128xbf16, #tpu.memory_space<vmem>>, %arg2: memref<128x256xbf16, #tpu.memory_space<vmem>>, %arg3: memref<1x256xf32, #tpu.memory_space<vmem>>, %arg4: memref<1x256xf32, #tpu.memory_space<vmem>>, %arg5: memref<1x256xf32, #tpu.memory_space<vmem>>, %arg6: memref<256x128xbf16, #tpu.memory_space<vmem>>, %arg7: memref<1x128xf32, #tpu.memory_space<vmem>>, %arg8: memref<8x128xf32, #tpu.memory_space<vmem>>) attributes {dimension_semantics = [#tpu.dimension_semantics<parallel>], iteration_bounds = array<i64: 1>, scalar_prefetch = 0 : i64, scratch_operands = 0 : i64, tpu.core_type = #tpu.core_type<tc>, window_params = [{transform_indices = @transform_0, window_bounds = array<i64: 8, 128>}, {pipeline_mode = #tpu.pipeline_mode<synchronous>, transform_indices = @transform_1, window_bounds = array<i64: 128, 256>}, {pipeline_mode = #tpu.pipeline_mode<synchronous>, transform_indices = @transform_2, window_bounds = array<i64: 1, 256>}, {pipeline_mode = #tpu.pipeline_mode<synchronous>, transform_indices = @transform_3, window_bounds = array<i64: 1, 256>}, {pipeline_mode = #tpu.pipeline_mode<synchronous>, transform_indices = @transform_4, window_bounds = array<i64: 1, 256>}, {pipeline_mode = #tpu.pipeline_mode<synchronous>, transform_indices = @transform_5, window_bounds = array<i64: 256, 128>}, {pipeline_mode = #tpu.pipeline_mode<synchronous>, transform_indices = @transform_6, window_bounds = array<i64: 1, 128>}, {transform_indices = @transform_7, window_bounds = array<i64: 8, 128>}]} {
    %c0 = arith.constant 0 : index
    %c0_0 = arith.constant 0 : index
    %0 = vector.load %arg2[%c0, %c0_0] : memref<128x256xbf16, #tpu.memory_space<vmem>>, vector<128x256xbf16>
    %c0_1 = arith.constant 0 : index
    %c0_2 = arith.constant 0 : index
    %1 = vector.load %arg6[%c0_1, %c0_2] : memref<256x128xbf16, #tpu.memory_space<vmem>>, vector<256x128xbf16>
    %c0_3 = arith.constant 0 : index
    %c0_4 = arith.constant 0 : index
    %2 = vector.load %arg3[%c0_3, %c0_4] : memref<1x256xf32, #tpu.memory_space<vmem>>, vector<1x256xf32>
    %c0_5 = arith.constant 0 : index
    %c0_6 = arith.constant 0 : index
    %3 = vector.load %arg4[%c0_5, %c0_6] : memref<1x256xf32, #tpu.memory_space<vmem>>, vector<1x256xf32>
    %c0_7 = arith.constant 0 : index
    %c0_8 = arith.constant 0 : index
    %4 = vector.load %arg5[%c0_7, %c0_8] : memref<1x256xf32, #tpu.memory_space<vmem>>, vector<1x256xf32>
    %c0_9 = arith.constant 0 : index
    %c0_10 = arith.constant 0 : index
    %5 = vector.load %arg7[%c0_9, %c0_10] : memref<1x128xf32, #tpu.memory_space<vmem>>, vector<1x128xf32>
    %c0_11 = arith.constant 0 : index
    %c0_12 = arith.constant 0 : index
    %6 = vector.load %arg1[%c0_11, %c0_12] : memref<8x128xbf16, #tpu.memory_space<vmem>>, vector<8x128xbf16>
    %cst = arith.constant dense<0.000000e+00> : vector<8x256xf32>
    %7 = tpu.matmul %6, %0, %cst {dimension_numbers = #tpu.dot_dimension_numbers<[1], [0], [0], [1], [0, 0, 1, 1], [], []>} : vector<8x128xbf16>, vector<128x256xbf16>, vector<8x256xf32> -> vector<8x256xf32>
    %8 = vector.broadcast %2 : vector<1x256xf32> to vector<8x256xf32>
    %9 = arith.addf %7, %8 : vector<8x256xf32>
    %cst_13 = arith.constant 0.000000e+00 : f32
    %10 = vector.broadcast %cst_13 : f32 to vector<8x256xf32>
    %11 = arith.maximumf %9, %10 : vector<8x256xf32>
    %cst_14 = arith.constant dense<0.000000e+00> : vector<8xf32>
    %12 = vector.multi_reduction <add>, %11, %cst_14 [1] : vector<8x256xf32> to vector<8xf32>
    %13 = vector.shape_cast %12 : vector<8xf32> to vector<8x1xf32>
    %14 = arith.mulf %11, %11 : vector<8x256xf32>
    %cst_15 = arith.constant dense<0.000000e+00> : vector<8xf32>
    %15 = vector.multi_reduction <add>, %14, %cst_15 [1] : vector<8x256xf32> to vector<8xf32>
    %16 = vector.shape_cast %15 : vector<8xf32> to vector<8x1xf32>
    %cst_16 = arith.constant 3.906250e-03 : f32
    %17 = vector.broadcast %cst_16 : f32 to vector<8x1xf32>
    %18 = arith.mulf %13, %17 : vector<8x1xf32>
    %cst_17 = arith.constant 3.906250e-03 : f32
    %19 = vector.broadcast %cst_17 : f32 to vector<8x1xf32>
    %20 = arith.mulf %16, %19 : vector<8x1xf32>
    %21 = arith.mulf %18, %18 : vector<8x1xf32>
    %22 = arith.subf %20, %21 : vector<8x1xf32>
    %23 = vector.broadcast %18 : vector<8x1xf32> to vector<8x256xf32>
    %24 = arith.subf %11, %23 : vector<8x256xf32>
    %cst_18 = arith.constant 9.99999974E-6 : f32
    %25 = vector.broadcast %cst_18 : f32 to vector<8x1xf32>
    %26 = arith.addf %22, %25 : vector<8x1xf32>
    %27 = math.rsqrt %26 : vector<8x1xf32>
    %28 = vector.broadcast %27 : vector<8x1xf32> to vector<8x256xf32>
    %29 = arith.mulf %24, %28 : vector<8x256xf32>
    %30 = vector.broadcast %3 : vector<1x256xf32> to vector<8x256xf32>
    %31 = arith.mulf %29, %30 : vector<8x256xf32>
    %32 = vector.broadcast %4 : vector<1x256xf32> to vector<8x256xf32>
    %33 = arith.addf %31, %32 : vector<8x256xf32>
    %34 = arith.truncf %33 : vector<8x256xf32> to vector<8x256xbf16>
    %cst_19 = arith.constant dense<0.000000e+00> : vector<8x128xf32>
    %35 = tpu.matmul %34, %1, %cst_19 {dimension_numbers = #tpu.dot_dimension_numbers<[1], [0], [0], [1], [0, 0, 1, 1], [], []>} : vector<8x256xbf16>, vector<256x128xbf16>, vector<8x128xf32> -> vector<8x128xf32>
    %36 = vector.broadcast %5 : vector<1x128xf32> to vector<8x128xf32>
    %37 = arith.addf %35, %36 : vector<8x128xf32>
    %c0_20 = arith.constant 0 : index
    %c0_21 = arith.constant 0 : index
    %38 = vector.load %arg8[%c0_20, %c0_21] : memref<8x128xf32, #tpu.memory_space<vmem>>, vector<8x128xf32>
    tpu.vector_store %arg8[%c0_20, %c0_21], %37 {strides = array<i32>} : memref<8x128xf32, #tpu.memory_space<vmem>>, vector<8x128xf32>,
    return
  }
  func.func @transform_0(%arg0: i32) -> (i32, i32) {
    %c0_i32 = arith.constant 0 : i32
    %c0_i32_0 = arith.constant 0 : i32
    return %arg0, %c0_i32 : i32, i32
  }
  func.func @transform_1(%arg0: i32) -> (i32, i32) {
    %c0_i32 = arith.constant 0 : i32
    %c0_i32_0 = arith.constant 0 : i32
    %c0_i32_1 = arith.constant 0 : i32
    return %c0_i32, %c0_i32_0 : i32, i32
  }
  func.func @transform_2(%arg0: i32) -> (i32, i32) {
    %c0_i32 = arith.constant 0 : i32
    %c0_i32_0 = arith.constant 0 : i32
    %c0_i32_1 = arith.constant 0 : i32
    return %c0_i32, %c0_i32_0 : i32, i32
  }
  func.func @transform_3(%arg0: i32) -> (i32, i32) {
    %c0_i32 = arith.constant 0 : i32
    %c0_i32_0 = arith.constant 0 : i32
    %c0_i32_1 = arith.constant 0 : i32
    return %c0_i32, %c0_i32_0 : i32, i32
  }
  func.func @transform_4(%arg0: i32) -> (i32, i32) {
    %c0_i32 = arith.constant 0 : i32
    %c0_i32_0 = arith.constant 0 : i32
    %c0_i32_1 = arith.constant 0 : i32
    return %c0_i32, %c0_i32_0 : i32, i32
  }
  func.func @transform_5(%arg0: i32) -> (i32, i32) {
    %c0_i32 = arith.constant 0 : i32
    %c0_i32_0 = arith.constant 0 : i32
    %c0_i32_1 = arith.constant 0 : i32
    return %c0_i32, %c0_i32_0 : i32, i32
  }
  func.func @transform_6(%arg0: i32) -> (i32, i32) {
    %c0_i32 = arith.constant 0 : i32
    %c0_i32_0 = arith.constant 0 : i32
    %c0_i32_1 = arith.constant 0 : i32
    return %c0_i32, %c0_i32_0 : i32, i32
  }
  func.func @transform_7(%arg0: i32) -> (i32, i32) {
    %c0_i32 = arith.constant 0 : i32
    %c0_i32_0 = arith.constant 0 : i32
    return %arg0, %c0_i32 : i32, i32
  }
}

</mosaic_0001>

<llo_original>
// kernel: tpu_custom_call.1
$region0: #{tpu_custom_call.1}
  #allocation0 [shape = 'u32[]', space=smem, size = 0x4, offset = 0x4, fixed_abs, tag = 'smem constant byte address 0x4 - core index']
  #allocation1 [shape = 'u32[144,128]{1,0:T(1,128)}', space=vmem, size = 0x12000, scoped, tag = 'internal scratch']
  %s0 = inlined_call_operand.hbm [shape: bf16[8,128], index: 0, kind: input, shape index: {}]
  %s1 = inlined_call_operand.hbm [shape: bf16[128,256], index: 1, kind: input, shape index: {}]
  %s2 = inlined_call_operand.vmem [shape: f32[1,256], index: 2, kind: input, shape index: {}]
  %s3 = inlined_call_operand.vmem [shape: f32[1,256], index: 3, kind: input, shape index: {}]
  %s4 = inlined_call_operand.vmem [shape: f32[1,256], index: 4, kind: input, shape index: {}]
  %s5 = inlined_call_operand.hbm [shape: bf16[256,128], index: 5, kind: input, shape index: {}]
  %s6 = inlined_call_operand.vmem [shape: f32[1,128], index: 6, kind: input, shape index: {}]
  %s7 = inlined_call_operand.hbm [shape: f32[8,128], index: 7, kind: output, shape index: {}]
  %s8 = sld [smem:[#allocation0]]
  $region50: #{tpu_custom_call.1} parent=0
    _
  %s10 = ssub.s32 1, %s8
  %s11 = scalar_select 0, %s10, %s8
  $region1: #{tpu_custom_call.1} parent=0
    #allocation2 [shape = 'u8[2048]{0}', space=vmem, size = 0x800, scoped, tag = 'input window, operand 0, single buffered']
    #allocation3 [shape = 's32[1]{0}', space=sflag, size = 0x4, scoped, tag = 'scoped memory for tpu_custom_call.1']
    #allocation4 [shape = 's32[1]{0}', space=sflag, size = 0x4, scoped, tag = 'scoped memory for tpu_custom_call.1']
    #allocation5 [shape = 'u8[65536]{0}', space=vmem, size = 0x10000, scoped, tag = 'input window, operand 1, single buffered']
    #allocation6 [shape = 's32[1]{0}', space=sflag, size = 0x4, scoped, tag = 'scoped memory for tpu_custom_call.1']
    #allocation7 [shape = 'u8[65536]{0}', space=vmem, size = 0x10000, scoped, tag = 'input window, operand 5, single buffered']
    #allocation8 [shape = 'u8[4096]{0}', space=vmem, size = 0x1000, scoped, tag = 'output window, operand 0, single buffered']
    %12 = vsyncpa [#allocation3], 0
    %13 = vsyncpa [#allocation6], 0
    %14 = vsyncpa [#allocation4], 0
    // Predicated region
    $region2: #{tpu_custom_call.1} parent=1 // pred_check
      _
    $region3: #{tpu_custom_call.1} parent=1 // pred_check_branch
      %16 = sbr.rel (0) target = $region5
    $region4: #{tpu_custom_call.1} parent=1 // pred_region
      %s18 = ssub.s32 64, 64
      %19 = vsyncadd [#allocation3], %s18
      %s21 = sshll.u32 [#allocation2], 4
      %s22 = int_to_ptr.vmem [resolvable:$true] %s21
      %24 = dma.hbm_to_vmem [thread:$0]  %s0, 64, %s22, [#allocation3]
    $region5: #{tpu_custom_call.1} parent=1 // pred_fallthru
      _
    // Predicated region
    $region6: #{tpu_custom_call.1} parent=1 // pred_check
      _
    $region7: #{tpu_custom_call.1} parent=1 // pred_check_branch
      %26 = sbr.rel (0) target = $region9
    $region8: #{tpu_custom_call.1} parent=1 // pred_region
      %s28 = ssub.s32 2048, 2048
      %29 = vsyncadd [#allocation6], %s28
      %s30 = sshll.u32 [#allocation5], 4
      %s31 = int_to_ptr.vmem [resolvable:$true] %s30
      %36 = dma.hbm_to_vmem [thread:$0]  %s1, 2048, %s31, [#allocation6], 128, 128, 8
    $region9: #{tpu_custom_call.1} parent=1 // pred_fallthru
      _
    // Predicated region
    $region10: #{tpu_custom_call.1} parent=1 // pred_check
      _
    $region11: #{tpu_custom_call.1} parent=1 // pred_check_branch
      %38 = sbr.rel (0) target = $region13
    $region12: #{tpu_custom_call.1} parent=1 // pred_region
      _
    $region13: #{tpu_custom_call.1} parent=1 // pred_fallthru
      _
    // Predicated region
    $region14: #{tpu_custom_call.1} parent=1 // pred_check
      _
    $region15: #{tpu_custom_call.1} parent=1 // pred_check_branch
      %40 = sbr.rel (0) target = $region17
    $region16: #{tpu_custom_call.1} parent=1 // pred_region
      _
    $region17: #{tpu_custom_call.1} parent=1 // pred_fallthru
      _
    // Predicated region
    $region18: #{tpu_custom_call.1} parent=1 // pred_check
      _
    $region19: #{tpu_custom_call.1} parent=1 // pred_check_branch
      %42 = sbr.rel (0) target = $region21
    $region20: #{tpu_custom_call.1} parent=1 // pred_region
      _
    $region21: #{tpu_custom_call.1} parent=1 // pred_fallthru
      _
    // Predicated region
    $region22: #{tpu_custom_call.1} parent=1 // pred_check
      _
    $region23: #{tpu_custom_call.1} parent=1 // pred_check_branch
      %44 = sbr.rel (0) target = $region25
    $region24: #{tpu_custom_call.1} parent=1 // pred_region
      %s46 = ssub.s32 2048, 2048
      %47 = vsyncadd [#allocation6], %s46
      %s48 = sshll.u32 [#allocation7], 4
      %s49 = int_to_ptr.vmem [resolvable:$true] %s48
      %54 = dma.hbm_to_vmem [thread:$0]  %s5, 2048, %s49, [#allocation6], 64, 64, 4
    $region25: #{tpu_custom_call.1} parent=1 // pred_fallthru
      _
    // Predicated region
    $region26: #{tpu_custom_call.1} parent=1 // pred_check
      _
    $region27: #{tpu_custom_call.1} parent=1 // pred_check_branch
      %56 = sbr.rel (0) target = $region29
    $region28: #{tpu_custom_call.1} parent=1 // pred_region
      _
    $region29: #{tpu_custom_call.1} parent=1 // pred_fallthru
      _
    // Predicated region
    $region30: #{tpu_custom_call.1} parent=1 // pred_check
      _
    $region31: #{tpu_custom_call.1} parent=1 // pred_check_branch
      %58 = sbr.rel (0) target = $region33
    $region32: #{tpu_custom_call.1} parent=1 // pred_region
      %59 = dma.done [#allocation3], 64
    $region33: #{tpu_custom_call.1} parent=1 // pred_fallthru
      _
    // Predicated region
    $region34: #{tpu_custom_call.1} parent=1 // pred_check
      _
    $region35: #{tpu_custom_call.1} parent=1 // pred_check_branch
      %61 = sbr.rel (0) target = $region37
    $region36: #{tpu_custom_call.1} parent=1 // pred_region
      %62 = dma.done [#allocation6], 2048
    $region37: #{tpu_custom_call.1} parent=1 // pred_fallthru
      _
    // Predicated region
    $region38: #{tpu_custom_call.1} parent=1 // pred_check
      _
    $region39: #{tpu_custom_call.1} parent=1 // pred_check_branch
      %64 = sbr.rel (0) target = $region41
    $region40: #{tpu_custom_call.1} parent=1 // pred_region
      %65 = dma.done [#allocation6], 2048
    $region41: #{tpu_custom_call.1} parent=1 // pred_fallthru
      _
    %v67 = vld [vmem:[#allocation5] sm:$0xff]
    %v68 = vld [vmem:[#allocation5 + $0x8] sm:$0xff]
    %v69 = vld [vmem:[#allocation5 + $0x10] sm:$0xff]
    %v70 = vld [vmem:[#allocation5 + $0x18] sm:$0xff]
    %v71 = vld [vmem:[#allocation5 + $0x20] sm:$0xff]
    %v72 = vld [vmem:[#allocation5 + $0x28] sm:$0xff]
    %v73 = vld [vmem:[#allocation5 + $0x30] sm:$0xff]
    %v74 = vld [vmem:[#allocation5 + $0x38] sm:$0xff]
    %v75 = vld [vmem:[#allocation5 + $0x40] sm:$0xff]
    %v76 = vld [vmem:[#allocation5 + $0x48] sm:$0xff]
    %v77 = vld [vmem:[#allocation5 + $0x50] sm:$0xff]
    %v78 = vld [vmem:[#allocation5 + $0x58] sm:$0xff]
    %v79 = vld [vmem:[#allocation5 + $0x60] sm:$0xff]
    %v80 = vld [vmem:[#allocation5 + $0x68] sm:$0xff]
    %v81 = vld [vmem:[#allocation5 + $0x70] sm:$0xff]
    %v82 = vld [vmem:[#allocation5 + $0x78] sm:$0xff]
    %v83 = vld [vmem:[#allocation7] sm:$0xf]
    %v84 = vld [vmem:[#allocation7 + $0x4] sm:$0xf]
    %v85 = vld [vmem:[#allocation7 + $0x8] sm:$0xf]
    %v86 = vld [vmem:[#allocation7 + $0xc] sm:$0xf]
    %v87 = vld [vmem:[#allocation7 + $0x10] sm:$0xf]
    %v88 = vld [vmem:[#allocation7 + $0x14] sm:$0xf]
    %v89 = vld [vmem:[#allocation7 + $0x18] sm:$0xf]
    %v90 = vld [vmem:[#allocation7 + $0x1c] sm:$0xf]
    %v91 = vld [vmem:[#allocation7 + $0x20] sm:$0xf]
    %v92 = vld [vmem:[#allocation7 + $0x24] sm:$0xf]
    %v93 = vld [vmem:[#allocation7 + $0x28] sm:$0xf]
    %v94 = vld [vmem:[#allocation7 + $0x2c] sm:$0xf]
    %v95 = vld [vmem:[#allocation7 + $0x30] sm:$0xf]
    %v96 = vld [vmem:[#allocation7 + $0x34] sm:$0xf]
    %v97 = vld [vmem:[#allocation7 + $0x38] sm:$0xf]
    %v98 = vld [vmem:[#allocation7 + $0x3c] sm:$0xf]
    %v99 = vld [vmem:[#allocation7 + $0x40] sm:$0xf]
    %v100 = vld [vmem:[#allocation7 + $0x44] sm:$0xf]
    %v101 = vld [vmem:[#allocation7 + $0x48] sm:$0xf]
    %v102 = vld [vmem:[#allocation7 + $0x4c] sm:$0xf]
    %v103 = vld [vmem:[#allocation7 + $0x50] sm:$0xf]
    %v104 = vld [vmem:[#allocation7 + $0x54] sm:$0xf]
    %v105 = vld [vmem:[#allocation7 + $0x58] sm:$0xf]
    %v106 = vld [vmem:[#allocation7 + $0x5c] sm:$0xf]
    %v107 = vld [vmem:[#allocation7 + $0x60] sm:$0xf]
    %v108 = vld [vmem:[#allocation7 + $0x64] sm:$0xf]
    %v109 = vld [vmem:[#allocation7 + $0x68] sm:$0xf]
    %v110 = vld [vmem:[#allocation7 + $0x6c] sm:$0xf]
    %v111 = vld [vmem:[#allocation7 + $0x70] sm:$0xf]
    %v112 = vld [vmem:[#allocation7 + $0x74] sm:$0xf]
    %v113 = vld [vmem:[#allocation7 + $0x78] sm:$0xf]
    %v114 = vld [vmem:[#allocation7 + $0x7c] sm:$0xf]
    %v115 = vld [vmem:[%s2] sm:$0x3]
    %v116 = vld [vmem:[%s3] sm:$0x3]
    %v117 = vld [vmem:[%s4] sm:$0x3]
    %v118 = vld [vmem:[%s6] sm:$0x1]
    %v119 = vld [vmem:[#allocation2] sm:$0xf]
    %v121 = vlaneseq
    %v122 = vshrl.u32 %v121, 7
    %v123 = vsub.s32 0, %v122
    %v124 = vrot.slane %v115, %v123
    %v125 = vlaneseq
    %v126 = vshrl.u32 %v125, 7
    %v127 = vsub.s32 1, %v126
    %v128 = vrot.slane %v115, %v127
    %v147 = vunpack.c.l.b16 %v67
    %v148 = vunpack.c.h.b16 %v67
    %v149 = vunpack.c.l.b16 %v68
    %v150 = vunpack.c.h.b16 %v68
    %v151 = vunpack.c.l.b16 %v69
    %v152 = vunpack.c.h.b16 %v69
    %v153 = vunpack.c.l.b16 %v70
    %v154 = vunpack.c.h.b16 %v70
    %v155 = vunpack.c.l.b16 %v71
    %v156 = vunpack.c.h.b16 %v71
    %v157 = vunpack.c.l.b16 %v72
    %v158 = vunpack.c.h.b16 %v72
    %v159 = vunpack.c.l.b16 %v73
    %v160 = vunpack.c.h.b16 %v73
    %v161 = vunpack.c.l.b16 %v74
    %v162 = vunpack.c.h.b16 %v74
    %v163 = vunpack.c.l.b16 %v75
    %v164 = vunpack.c.h.b16 %v75
    %v165 = vunpack.c.l.b16 %v76
    %v166 = vunpack.c.h.b16 %v76
    %v167 = vunpack.c.l.b16 %v77
    %v168 = vunpack.c.h.b16 %v77
    %v169 = vunpack.c.l.b16 %v78
    %v170 = vunpack.c.h.b16 %v78
    %v171 = vunpack.c.l.b16 %v79
    %v172 = vunpack.c.h.b16 %v79
    %v173 = vunpack.c.l.b16 %v80
    %v174 = vunpack.c.h.b16 %v80
    %v175 = vunpack.c.l.b16 %v81
    %v176 = vunpack.c.h.b16 %v81
    %v177 = vunpack.c.l.b16 %v82
    %v178 = vunpack.c.h.b16 %v82
    %v179 = vpack.c.b16 %v149, %v147
    %v180 = vpack.c.b16 %v150, %v148
    %v181 = vpack.c.b16 %v153, %v151
    %v182 = vpack.c.b16 %v154, %v152
    %v183 = vpack.c.b16 %v157, %v155
    %v184 = vpack.c.b16 %v158, %v156
    %v185 = vpack.c.b16 %v161, %v159
    %v186 = vpack.c.b16 %v162, %v160
    %v187 = vpack.c.b16 %v165, %v163
    %v188 = vpack.c.b16 %v166, %v164
    %v189 = vpack.c.b16 %v169, %v167
    %v190 = vpack.c.b16 %v170, %v168
    %v191 = vpack.c.b16 %v173, %v171
    %v192 = vpack.c.b16 %v174, %v172
    %v193 = vpack.c.b16 %v177, %v175
    %v194 = vpack.c.b16 %v178, %v176
    %211 = vmatprep.subr.bf16.mxu0 %v180
    %212 = vmatpush1.bf16.msra.mxu0 %v179
    %213 = vmatprep.subr.bf16.mxu0 %v182
    %214 = vmatpush1.bf16.msra.mxu0 %v181
    %215 = vmatprep.subr.bf16.mxu0 %v184
    %216 = vmatpush1.bf16.msra.mxu0 %v183
    %217 = vmatprep.subr.bf16.mxu0 %v186
    %218 = vmatpush1.bf16.msra.mxu0 %v185
    %219 = vmatprep.subr.bf16.mxu0 %v188
    %220 = vmatpush1.bf16.msra.mxu0 %v187
    %221 = vmatprep.subr.bf16.mxu0 %v190
    %222 = vmatpush1.bf16.msra.mxu0 %v189
    %223 = vmatprep.subr.bf16.mxu0 %v192
    %224 = vmatpush1.bf16.msra.mxu0 %v191
    %225 = vmatprep.subr.bf16.mxu0 %v194
    %226 = vmatpush1.bf16.msra.mxu0 %v193
    %227 = vmatprep.subr.bf16.mxu0 0
    %228 = vmatpush1.bf16.msra.mxu0 0
    %229 = vmatprep.subr.bf16.mxu0 0
    %230 = vmatpush1.bf16.msra.mxu0 0
    %231 = vmatprep.subr.bf16.mxu0 0
    %232 = vmatpush1.bf16.msra.mxu0 0
    %233 = vmatprep.subr.bf16.mxu0 0
    %234 = vmatpush1.bf16.msra.mxu0 0
    %235 = vmatprep.subr.bf16.mxu0 0
    %236 = vmatpush1.bf16.msra.mxu0 0
    %237 = vmatprep.subr.bf16.mxu0 0
    %238 = vmatpush1.bf16.msra.mxu0 0
    %239 = vmatprep.subr.bf16.mxu0 0
    %240 = vmatpush1.bf16.msra.mxu0 0
    %241 = vmatprep.subr.bf16.mxu0 0
    %242 = vmatpush1.bf16.msra.mxu0 0
    %243 = vmatprep.mubr.bf16.mxu0 0
    %244 = vmatmul.mubr.bf16.gmra.mrb[0].mxu0 %v119
    %v245 = vpop.f32.mrb[0].mxu0
    %v246 = vadd.f32 %v124, %v245
    %v247 = vpop.f32.mrb[0].mxu0
    %v248 = vadd.f32 %v128, %v247
    %v249 = vpop.f32.mrb[0].mxu0
    %v250 = vpop.f32.mrb[0].mxu0
    %251 = vdwg.mxu0
    %v252 = vmax.f32 %v246, 0.0
    %v253 = vmax.f32 %v248, 0.0
    %v254 = vadd.f32 %v252, %v253
    %255 = vadd.xlane.f32.xlu0 %v254
    %v256 = vpop.xlane.xlu0 %255
    %v257 = vmul.f32 %v252, %v252
    %v258 = vmul.f32 %v253, %v253
    %v259 = vadd.f32 %v257, %v258
    %260 = vadd.xlane.f32.xlu0 %v259
    %v261 = vpop.xlane.xlu0 %260
    %v262 = vmul.f32 %v256, 0.00390625
    %v263 = vmul.f32 %v261, 0.00390625
    %v264 = vmul.f32 %v262, %v262
    %v265 = vsub.f32 %v263, %v264
    %v266 = vsub.f32 %v252, %v262
    %v267 = vsub.f32 %v253, %v262
    %v268 = vadd.f32 %v265, 1e-05
    %v269 = vrsqrt.pop %v268
    %v270 = vmul.f32 %v266, %v269
    %v271 = vmul.f32 %v267, %v269
    %v273 = vlaneseq
    %v274 = vshrl.u32 %v273, 7
    %v275 = vsub.s32 0, %v274
    %v276 = vrot.slane %v116, %v275
    %v277 = vlaneseq
    %v278 = vshrl.u32 %v277, 7
    %v279 = vsub.s32 1, %v278
    %v280 = vrot.slane %v116, %v279
    %v283 = vmul.f32 %v270, %v276
    %v284 = vmul.f32 %v271, %v280
    %v286 = vlaneseq
    %v287 = vshrl.u32 %v286, 7
    %v288 = vsub.s32 0, %v287
    %v289 = vrot.slane %v117, %v288
    %v290 = vlaneseq
    %v291 = vshrl.u32 %v290, 7
    %v292 = vsub.s32 1, %v291
    %v293 = vrot.slane %v117, %v292
    %v296 = vadd.f32 %v283, %v289
    %v297 = vadd.f32 %v284, %v293
    %v298 = vpack.c.bf16 %v296, %v296
    %v299 = vpack.c.bf16 %v297, %v297
    %v301 = vlaneseq
    %v302 = vshrl.u32 %v301, 7
    %v303 = vsub.s32 0, %v302
    %v304 = vrot.slane %v118, %v303
    %v338 = vunpack.c.l.b16 %v83
    %v339 = vunpack.c.l.b16 %v84
    %v340 = vunpack.c.l.b16 %v85
    %v341 = vunpack.c.l.b16 %v86
    %v342 = vunpack.c.l.b16 %v87
    %v343 = vunpack.c.l.b16 %v88
    %v344 = vunpack.c.l.b16 %v89
    %v345 = vunpack.c.l.b16 %v90
    %v346 = vunpack.c.l.b16 %v91
    %v347 = vunpack.c.l.b16 %v92
    %v348 = vunpack.c.l.b16 %v93
    %v349 = vunpack.c.l.b16 %v94
    %v350 = vunpack.c.l.b16 %v95
    %v351 = vunpack.c.l.b16 %v96
    %v352 = vunpack.c.l.b16 %v97
    %v353 = vunpack.c.l.b16 %v98
    %v354 = vunpack.c.l.b16 %v99
    %v355 = vunpack.c.l.b16 %v100
    %v356 = vunpack.c.l.b16 %v101
    %v357 = vunpack.c.l.b16 %v102
    %v358 = vunpack.c.l.b16 %v103
    %v359 = vunpack.c.l.b16 %v104
    %v360 = vunpack.c.l.b16 %v105
    %v361 = vunpack.c.l.b16 %v106
    %v362 = vunpack.c.l.b16 %v107
    %v363 = vunpack.c.l.b16 %v108
    %v364 = vunpack.c.l.b16 %v109
    %v365 = vunpack.c.l.b16 %v110
    %v366 = vunpack.c.l.b16 %v111
    %v367 = vunpack.c.l.b16 %v112
    %v368 = vunpack.c.l.b16 %v113
    %v369 = vunpack.c.l.b16 %v114
    %v370 = vpack.c.b16 %v339, %v338
    %v371 = vpack.c.b16 %v341, %v340
    %v372 = vpack.c.b16 %v343, %v342
    %v373 = vpack.c.b16 %v345, %v344
    %v374 = vpack.c.b16 %v347, %v346
    %v375 = vpack.c.b16 %v349, %v348
    %v376 = vpack.c.b16 %v351, %v350
    %v377 = vpack.c.b16 %v353, %v352
    %v378 = vpack.c.b16 %v355, %v354
    %v379 = vpack.c.b16 %v357, %v356
    %v380 = vpack.c.b16 %v359, %v358
    %v381 = vpack.c.b16 %v361, %v360
    %v382 = vpack.c.b16 %v363, %v362
    %v383 = vpack.c.b16 %v365, %v364
    %v384 = vpack.c.b16 %v367, %v366
    %v385 = vpack.c.b16 %v369, %v368
    %402 = vmatprep.subr.bf16.mxu0 0
    %403 = vmatpush1.bf16.msra.mxu0 %v370
    %404 = vmatprep.subr.bf16.mxu0 0
    %405 = vmatpush1.bf16.msra.mxu0 %v371
    %406 = vmatprep.subr.bf16.mxu0 0
    %407 = vmatpush1.bf16.msra.mxu0 %v372
    %408 = vmatprep.subr.bf16.mxu0 0
    %409 = vmatpush1.bf16.msra.mxu0 %v373
    %410 = vmatprep.subr.bf16.mxu0 0
    %411 = vmatpush1.bf16.msra.mxu0 %v374
    %412 = vmatprep.subr.bf16.mxu0 0
    %413 = vmatpush1.bf16.msra.mxu0 %v375
    %414 = vmatprep.subr.bf16.mxu0 0
    %415 = vmatpush1.bf16.msra.mxu0 %v376
    %416 = vmatprep.subr.bf16.mxu0 0
    %417 = vmatpush1.bf16.msra.mxu0 %v377
    %418 = vmatprep.subr.bf16.mxu0 0
    %419 = vmatpush1.bf16.msra.mxu0 %v378
    %420 = vmatprep.subr.bf16.mxu0 0
    %421 = vmatpush1.bf16.msra.mxu0 %v379
    %422 = vmatprep.subr.bf16.mxu0 0
    %423 = vmatpush1.bf16.msra.mxu0 %v380
    %424 = vmatprep.subr.bf16.mxu0 0
    %425 = vmatpush1.bf16.msra.mxu0 %v381
    %426 = vmatprep.subr.bf16.mxu0 0
    %427 = vmatpush1.bf16.msra.mxu0 %v382
    %428 = vmatprep.subr.bf16.mxu0 0
    %429 = vmatpush1.bf16.msra.mxu0 %v383
    %430 = vmatprep.subr.bf16.mxu0 0
    %431 = vmatpush1.bf16.msra.mxu0 %v384
    %432 = vmatprep.subr.bf16.mxu0 0
    %433 = vmatpush1.bf16.msra.mxu0 %v385
    %434 = vmatprep.mubr.bf16.mxu0 %v299
    %435 = vmatmul.mubr.bf16.gmra.mrb[0].mxu0 %v298
    %v436 = vpop.f32.mrb[0].mxu0
    %v437 = vadd.f32 %v304, %v436
    %v438 = vpop.f32.mrb[0].mxu0
    %v439 = vpop.f32.mrb[0].mxu0
    %v440 = vpop.f32.mrb[0].mxu0
    %441 = vdwg.mxu0
    %442 = vst [vmem:[#allocation8] sm:$0xff] %v437
    // Predicated region
    $region42: #{tpu_custom_call.1} parent=1 // pred_check
      _
    $region43: #{tpu_custom_call.1} parent=1 // pred_check_branch
      %444 = sbr.rel (0) target = $region45
    $region44: #{tpu_custom_call.1} parent=1 // pred_region
      %s446 = ssub.s32 128, 128
      %447 = vsyncadd [#allocation4], %s446
      %s449 = sshll.u32 [#allocation8], 4
      %s450 = int_to_ptr.vmem [resolvable:$true] %s449
      %452 = dma.vmem_to_hbm [thread:$0]  %s450, 128, %s7, [#allocation4]
    $region45: #{tpu_custom_call.1} parent=1 // pred_fallthru
      _
    // Predicated region
    $region46: #{tpu_custom_call.1} parent=1 // pred_check
      _
    $region47: #{tpu_custom_call.1} parent=1 // pred_check_branch
      %454 = sbr.rel (0) target = $region49
    $region48: #{tpu_custom_call.1} parent=1 // pred_region
      %455 = dma.done [#allocation4], 128
    $region49: #{tpu_custom_call.1} parent=1 // pred_fallthru
      _
    %456 = vsyncpa [#allocation3], 1
    %457 = vsyncpa [#allocation6], 1
    %458 = vsyncpa [#allocation4], 1

</llo_original>
